<compile_context>
chip_gen: v6e
topology: v6e:2x2x1
jax: 0.10.0
libtpu: 0.0.40
codegen_flags: <defaults>
</compile_context>

<pallas_src>
import jax
import jax.numpy as jnp
from jax.experimental import pallas as pl
from jax.experimental.pallas import tpu as pltpu


def _qnet_kernel(x_ref, w12_ref, b12_ref, w3_ref, b3_ref, o_ref):
    # Whole (folded) MLP for one batch tile; weights stay resident in VMEM.
    x = x_ref[...]
    # Folded layer 1+2 (no activation between them in the module): Linear(D, 48)
    h = jnp.dot(x, w12_ref[...], preferred_element_type=jnp.float32) + b12_ref[...]
    h = jnp.tanh(h)
    # Layer 3: Linear(48, A). A narrow (A < 128 lanes) masked store is far
    # cheaper than 128-lane-padding the output and re-slicing it in HBM.
    out = jnp.dot(h, w3_ref[...], preferred_element_type=jnp.float32) + b3_ref[...]
    o_ref[...] = out.astype(o_ref.dtype)


def fold_params(params):
    """Fold the two activation-free Linears. Call ONCE per parameter update,
    outside the per-step inference path."""
    w1, b1, w2, b2, w3, b3 = params
    w12 = jnp.dot(w1, w2, preferred_element_type=jnp.float32)       # (D, 48)
    b12 = jnp.dot(b1, w2, preferred_element_type=jnp.float32) + b2  # (1, 48)
    return w12, b12, w3, b3


def _choose_batch_tile(B, batch_tile):
    # Cap so double-buffered, lane-padded tiles stay well under the scoped
    # VMEM default on all generations (incl. v7x's 64 MiB physical VMEM).
    batch_tile = max(8, min(int(batch_tile), 8192))
    if B < 16:
        # Tiny batch: one grid step covering the whole batch (block dim equals
        # the full array dim, so no 8-row divisibility requirement).
        return B
    # >= 2 grid steps (v7x megacore), even step count so both TensorCores get
    # equal work, tiles a multiple of 8 rows, capped at `batch_tile` rows.
    n_steps = max(2, pl.cdiv(B, batch_tile))
    if n_steps % 2:
        n_steps += 1
    return pl.cdiv(pl.cdiv(B, n_steps), 8) * 8


def qnetwork_forward(x, folded_params, *, batch_tile=2048):
    """Pallas forward of Network, given the output of fold_params()."""
    w12, b12, w3, b3 = folded_params
    B, D = x.shape
    H = w12.shape[1]          # 48
    A = w3.shape[1]           # dim_actions

    bt = _choose_batch_tile(B, batch_tile)
    grid = (pl.cdiv(B, bt),)  # ragged last block is masked by Pallas

    # Weights/biases never change across grid steps -> single buffer.
    resident = pl.Buffered(1)

    return pl.pallas_call(
        _qnet_kernel,
        out_shape=jax.ShapeDtypeStruct((B, A), jnp.float32),
        grid_spec=pltpu.PrefetchScalarGridSpec(
            num_scalar_prefetch=0,
            grid=grid,
            in_specs=[
                pl.BlockSpec((bt, D), lambda i: (i, 0)),                       # x tile
                pl.BlockSpec((D, H), lambda i: (0, 0), pipeline_mode=resident),  # W12
                pl.BlockSpec((1, H), lambda i: (0, 0), pipeline_mode=resident),  # b12
                pl.BlockSpec((H, A), lambda i: (0, 0), pipeline_mode=resident),  # W3
                pl.BlockSpec((1, A), lambda i: (0, 0), pipeline_mode=resident),  # b3
            ],
            out_specs=pl.BlockSpec((bt, A), lambda i: (i, 0)),                 # (B, A) direct
        ),
        compiler_params=pltpu.CompilerParams(
            dimension_semantics=("parallel",)),
    )(x, w12, b12, w3, b3)


def init_params(key, dim_states, dim_actions):
    """Deterministic init mimicking nn.Linear default: U(-1/sqrt(fan_in), +)."""
    def linear(key, fan_in, fan_out):
        kw, kb = jax.random.split(key)
        bound = 1.0 / jnp.sqrt(jnp.float32(fan_in))
        w = jax.random.uniform(kw, (fan_in, fan_out), jnp.float32, -bound, bound)
        b = jax.random.uniform(kb, (1, fan_out), jnp.float32, -bound, bound)
        return w, b

    k1, k2, k3 = jax.random.split(key, 3)
    w1, b1 = linear(k1, dim_states, 24)
    w2, b2 = linear(k2, 24, 48)
    w3, b3 = linear(k3, 48, dim_actions)
    return (w1, b1, w2, b2, w3, b3)


def reference_forward(x, params):
    w1, b1, w2, b2, w3, b3 = params
    h1 = x @ w1 + b1                 # Linear(D, 24)   (no activation, as in module)
    h2 = jnp.tanh(h1 @ w2 + b2)      # Linear(24, 48) -> tanh
    return h2 @ w3 + b3              # Linear(48, A)


if __name__ == "__main__":
    key = jax.random.PRNGKey(0)
    dim_states, dim_actions, batch = 4, 2, 2

    k_param, k_x = jax.random.split(key)
    params = init_params(k_param, dim_states, dim_actions)
    x = jax.random.normal(k_x, (batch, dim_states), jnp.float32)

    # Fold once per parameter update (hoisted out of the per-call hot path).
    folded = fold_params(params)
    fwd = jax.jit(qnetwork_forward)

    out = jax.block_until_ready(fwd(x, folded))
    ref = reference_forward(x, params)
    assert out.shape == (batch, dim_actions)
    assert jnp.allclose(out, ref, atol=1e-5, rtol=1e-5)

    # Exercise the mid-size (>=2 parallel steps) and ragged multi-tile paths.
    for big_B in (64, 600):
        xb = jax.random.normal(jax.random.PRNGKey(big_B), (big_B, dim_states),
                               jnp.float32)
        out_b = jax.block_until_ready(fwd(xb, folded))
        ref_b = reference_forward(xb, params)
        assert out_b.shape == (big_B, dim_actions)
        assert jnp.allclose(out_b, ref_b, atol=1e-5, rtol=1e-5)

    print("KERNEL_OK")
</pallas_src>

<mosaic_0001>
module attributes {stable_mosaic.version = 11 : i64} {
  func.func @_qnet_kernel(%arg0: i32, %arg1: memref<2x4xf32, #tpu.memory_space<vmem>>, %arg2: memref<4x48xf32, #tpu.memory_space<vmem>>, %arg3: memref<1x48xf32, #tpu.memory_space<vmem>>, %arg4: memref<48x2xf32, #tpu.memory_space<vmem>>, %arg5: memref<1x2xf32, #tpu.memory_space<vmem>>, %arg6: memref<2x2xf32, #tpu.memory_space<vmem>>) attributes {dimension_semantics = [#tpu.dimension_semantics<parallel>], iteration_bounds = array<i64: 1>, scalar_prefetch = 0 : i64, scratch_operands = 0 : i64, tpu.core_type = #tpu.core_type<tc>, window_params = [{transform_indices = @transform_0, window_bounds = array<i64: 2, 4>}, {pipeline_mode = #tpu.pipeline_mode<synchronous>, transform_indices = @transform_1, window_bounds = array<i64: 4, 48>}, {pipeline_mode = #tpu.pipeline_mode<synchronous>, transform_indices = @transform_2, window_bounds = array<i64: 1, 48>}, {pipeline_mode = #tpu.pipeline_mode<synchronous>, transform_indices = @transform_3, window_bounds = array<i64: 48, 2>}, {pipeline_mode = #tpu.pipeline_mode<synchronous>, transform_indices = @transform_4, window_bounds = array<i64: 1, 2>}, {transform_indices = @transform_5, window_bounds = array<i64: 2, 2>}]} {
    %c0 = arith.constant 0 : index
    %c0_0 = arith.constant 0 : index
    %0 = vector.load %arg1[%c0, %c0_0] : memref<2x4xf32, #tpu.memory_space<vmem>>, vector<2x4xf32>
    %c0_1 = arith.constant 0 : index
    %c0_2 = arith.constant 0 : index
    %1 = vector.load %arg2[%c0_1, %c0_2] : memref<4x48xf32, #tpu.memory_space<vmem>>, vector<4x48xf32>
    %cst = arith.constant dense<0.000000e+00> : vector<2x48xf32>
    %2 = tpu.matmul %0, %1, %cst {dimension_numbers = #tpu.dot_dimension_numbers<[1], [0], [0], [1], [0, 0, 1, 1], [], []>} : vector<2x4xf32>, vector<4x48xf32>, vector<2x48xf32> -> vector<2x48xf32>
    %c0_3 = arith.constant 0 : index
    %c0_4 = arith.constant 0 : index
    %3 = vector.load %arg3[%c0_3, %c0_4] : memref<1x48xf32, #tpu.memory_space<vmem>>, vector<1x48xf32>
    %4 = vector.broadcast %3 : vector<1x48xf32> to vector<2x48xf32>
    %5 = arith.addf %2, %4 : vector<2x48xf32>
    %6 = math.tanh %5 : vector<2x48xf32>
    %c0_5 = arith.constant 0 : index
    %c0_6 = arith.constant 0 : index
    %7 = vector.load %arg4[%c0_5, %c0_6] : memref<48x2xf32, #tpu.memory_space<vmem>>, vector<48x2xf32>
    %cst_7 = arith.constant dense<0.000000e+00> : vector<2x2xf32>
    %8 = tpu.matmul %6, %7, %cst_7 {dimension_numbers = #tpu.dot_dimension_numbers<[1], [0], [0], [1], [0, 0, 1, 1], [], []>} : vector<2x48xf32>, vector<48x2xf32>, vector<2x2xf32> -> vector<2x2xf32>
    %c0_8 = arith.constant 0 : index
    %c0_9 = arith.constant 0 : index
    %9 = vector.load %arg5[%c0_8, %c0_9] : memref<1x2xf32, #tpu.memory_space<vmem>>, vector<1x2xf32>
    %10 = vector.broadcast %9 : vector<1x2xf32> to vector<2x2xf32>
    %11 = arith.addf %8, %10 : vector<2x2xf32>
    %c0_10 = arith.constant 0 : index
    %c0_11 = arith.constant 0 : index
    %12 = vector.load %arg6[%c0_10, %c0_11] : memref<2x2xf32, #tpu.memory_space<vmem>>, vector<2x2xf32>
    tpu.vector_store %arg6[%c0_10, %c0_11], %11 {strides = array<i32>} : memref<2x2xf32, #tpu.memory_space<vmem>>, vector<2x2xf32>,
    return
  }
  func.func @transform_0(%arg0: i32) -> (i32, i32) {
    %c0_i32 = arith.constant 0 : i32
    %c0_i32_0 = arith.constant 0 : i32
    return %arg0, %c0_i32 : i32, i32
  }
  func.func @transform_1(%arg0: i32) -> (i32, i32) {
    %c0_i32 = arith.constant 0 : i32
    %c0_i32_0 = arith.constant 0 : i32
    %c0_i32_1 = arith.constant 0 : i32
    return %c0_i32, %c0_i32_0 : i32, i32
  }
  func.func @transform_2(%arg0: i32) -> (i32, i32) {
    %c0_i32 = arith.constant 0 : i32
    %c0_i32_0 = arith.constant 0 : i32
    %c0_i32_1 = arith.constant 0 : i32
    return %c0_i32, %c0_i32_0 : i32, i32
  }
  func.func @transform_3(%arg0: i32) -> (i32, i32) {
    %c0_i32 = arith.constant 0 : i32
    %c0_i32_0 = arith.constant 0 : i32
    %c0_i32_1 = arith.constant 0 : i32
    return %c0_i32, %c0_i32_0 : i32, i32
  }
  func.func @transform_4(%arg0: i32) -> (i32, i32) {
    %c0_i32 = arith.constant 0 : i32
    %c0_i32_0 = arith.constant 0 : i32
    %c0_i32_1 = arith.constant 0 : i32
    return %c0_i32, %c0_i32_0 : i32, i32
  }
  func.func @transform_5(%arg0: i32) -> (i32, i32) {
    %c0_i32 = arith.constant 0 : i32
    %c0_i32_0 = arith.constant 0 : i32
    return %arg0, %c0_i32 : i32, i32
  }
}

</mosaic_0001>

<llo_original>
// kernel: qnetwork_forward.1
$region0: #{qnetwork_forward.1}
  #allocation0 [shape = 'u32[]', space=smem, size = 0x4, offset = 0x4, fixed_abs, tag = 'smem constant byte address 0x4 - core index']
  #allocation1 [shape = 'u32[144,128]{1,0:T(1,128)}', space=vmem, size = 0x12000, scoped, tag = 'internal scratch']
  %s0 = inlined_call_operand.vmem [shape: f32[2,4], index: 0, kind: input, shape index: {}]
  %s1 = inlined_call_operand.vmem [shape: f32[4,48], index: 1, kind: input, shape index: {}]
  %s2 = inlined_call_operand.vmem [shape: f32[1,48], index: 2, kind: input, shape index: {}]
  %s3 = inlined_call_operand.vmem [shape: f32[48,2], index: 3, kind: input, shape index: {}]
  %s4 = inlined_call_operand.vmem [shape: f32[1,2], index: 4, kind: input, shape index: {}]
  %s5 = inlined_call_operand.hbm [shape: f32[2,2], index: 5, kind: output, shape index: {}]
  %s6 = sld [smem:[#allocation0]]
  $region30: #{qnetwork_forward.1} parent=0
    _
  %s8 = ssub.s32 1, %s6
  %s9 = scalar_select 0, %s8, %s6
  $region1: #{qnetwork_forward.1} parent=0
    #allocation2 [shape = 'u8[1024]{0}', space=vmem, size = 0x400, scoped, tag = 'output window, operand 0, single buffered']
    #allocation3 [shape = 's32[1]{0}', space=sflag, size = 0x4, scoped, tag = 'scoped memory for qnetwork_forward.1']
    %10 = vsyncpa [#allocation3], 0
    // Predicated region
    $region2: #{qnetwork_forward.1} parent=1 // pred_check
      _
    $region3: #{qnetwork_forward.1} parent=1 // pred_check_branch
      %12 = sbr.rel (0) target = $region5
    $region4: #{qnetwork_forward.1} parent=1 // pred_region
      _
    $region5: #{qnetwork_forward.1} parent=1 // pred_fallthru
      _
    // Predicated region
    $region6: #{qnetwork_forward.1} parent=1 // pred_check
      _
    $region7: #{qnetwork_forward.1} parent=1 // pred_check_branch
      %14 = sbr.rel (0) target = $region9
    $region8: #{qnetwork_forward.1} parent=1 // pred_region
      _
    $region9: #{qnetwork_forward.1} parent=1 // pred_fallthru
      _
    // Predicated region
    $region10: #{qnetwork_forward.1} parent=1 // pred_check
      _
    $region11: #{qnetwork_forward.1} parent=1 // pred_check_branch
      %16 = sbr.rel (0) target = $region13
    $region12: #{qnetwork_forward.1} parent=1 // pred_region
      _
    $region13: #{qnetwork_forward.1} parent=1 // pred_fallthru
      _
    // Predicated region
    $region14: #{qnetwork_forward.1} parent=1 // pred_check
      _
    $region15: #{qnetwork_forward.1} parent=1 // pred_check_branch
      %18 = sbr.rel (0) target = $region17
    $region16: #{qnetwork_forward.1} parent=1 // pred_region
      _
    $region17: #{qnetwork_forward.1} parent=1 // pred_fallthru
      _
    // Predicated region
    $region18: #{qnetwork_forward.1} parent=1 // pred_check
      _
    $region19: #{qnetwork_forward.1} parent=1 // pred_check_branch
      %20 = sbr.rel (0) target = $region21
    $region20: #{qnetwork_forward.1} parent=1 // pred_region
      _
    $region21: #{qnetwork_forward.1} parent=1 // pred_fallthru
      _
    %v21 = vld [vmem:[%s0] sm:$0x3]
    %v22 = vld [vmem:[%s1] sm:$0xf]
    %v23 = vld [vmem:[%s2] sm:$0x1]
    %v25 = vlaneseq
    %v26 = vshrl.u32 %v25, 7
    %v27 = vsub.s32 0, %v26
    %v28 = vrot.slane %v23, %v27
    %vm30 = vcmask 31744
    %v32 = vsel %vm30, %v21, 0
    %vm34 = vcmask 1043456
    %v36 = vsel %vm34, %v22, 0
    %38 = vmatprep.subr.mxu0 0.0
    %39 = vmatpush1.msra.mxu0 0.0
    %40 = vmatprep.subr.mxu0 0.0
    %41 = vmatpush1.msra.mxu0 0.0
    %42 = vmatprep.subr.mxu0 0.0
    %43 = vmatpush1.msra.mxu0 0.0
    %44 = vmatprep.subr.mxu0 0.0
    %45 = vmatpush1.msra.mxu0 0.0
    %46 = vmatprep.subr.mxu0 0.0
    %47 = vmatpush1.msra.mxu0 0.0
    %48 = vmatprep.subr.mxu0 0.0
    %49 = vmatpush1.msra.mxu0 0.0
    %50 = vmatprep.subr.mxu0 0.0
    %51 = vmatpush1.msra.mxu0 0.0
    %52 = vmatprep.subr.mxu0 0.0
    %53 = vmatpush1.msra.mxu0 0.0
    %54 = vmatprep.subr.mxu0 0.0
    %55 = vmatpush1.msra.mxu0 0.0
    %56 = vmatprep.subr.mxu0 0.0
    %57 = vmatpush1.msra.mxu0 0.0
    %58 = vmatprep.subr.mxu0 0.0
    %59 = vmatpush1.msra.mxu0 0.0
    %60 = vmatprep.subr.mxu0 0.0
    %61 = vmatpush1.msra.mxu0 0.0
    %62 = vmatprep.subr.mxu0 0.0
    %63 = vmatpush1.msra.mxu0 0.0
    %64 = vmatprep.subr.mxu0 0.0
    %65 = vmatpush1.msra.mxu0 0.0
    %66 = vmatprep.subr.mxu0 0.0
    %67 = vmatpush1.msra.mxu0 0.0
    %68 = vmatprep.subr.mxu0 0.0
    %69 = vmatpush1.msra.mxu0 %v36
    %70 = vmatprep.subr.mxu0 0.0
    %71 = vmatpush2.msra.mxu0 0.0
    %72 = vmatprep.subr.mxu0 0.0
    %73 = vmatpush2.msra.mxu0 0.0
    %74 = vmatprep.subr.mxu0 0.0
    %75 = vmatpush2.msra.mxu0 0.0
    %76 = vmatprep.subr.mxu0 0.0
    %77 = vmatpush2.msra.mxu0 0.0
    %78 = vmatprep.subr.mxu0 0.0
    %79 = vmatpush2.msra.mxu0 0.0
    %80 = vmatprep.subr.mxu0 0.0
    %81 = vmatpush2.msra.mxu0 0.0
    %82 = vmatprep.subr.mxu0 0.0
    %83 = vmatpush2.msra.mxu0 0.0
    %84 = vmatprep.subr.mxu0 0.0
    %85 = vmatpush2.msra.mxu0 0.0
    %86 = vmatprep.subr.mxu0 0.0
    %87 = vmatpush2.msra.mxu0 0.0
    %88 = vmatprep.subr.mxu0 0.0
    %89 = vmatpush2.msra.mxu0 0.0
    %90 = vmatprep.subr.mxu0 0.0
    %91 = vmatpush2.msra.mxu0 0.0
    %92 = vmatprep.subr.mxu0 0.0
    %93 = vmatpush2.msra.mxu0 0.0
    %94 = vmatprep.subr.mxu0 0.0
    %95 = vmatpush2.msra.mxu0 0.0
    %96 = vmatprep.subr.mxu0 0.0
    %97 = vmatpush2.msra.mxu0 0.0
    %98 = vmatprep.subr.mxu0 0.0
    %99 = vmatpush2.msra.mxu0 0.0
    %100 = vmatprep.subr.mxu0 0.0
    %101 = vmatpush2.msra.mxu0 0.0
    %102 = vmatprep.mubr.f32.mxu0 0.0
    %103 = vmatmul.mubr.f32.gmra.mxu0 %v32
    %v104 = vpop.f32.mrf.mxu0
    %v105 = vadd.f32 %v28, %v104
    %v106 = vpop.f32.mrf.mxu0
    %107 = vdwg.mxu0
    %v108 = vtanh.pop %v105
    %v109 = vld [vmem:[%s3] sm:$0xff]
    %v110 = vld [vmem:[%s3 + $0x8] sm:$0xff]
    %v111 = vld [vmem:[%s3 + $0x10] sm:$0xff]
    %v112 = vld [vmem:[%s3 + $0x18] sm:$0xff]
    %v113 = vld [vmem:[%s3 + $0x20] sm:$0xff]
    %v114 = vld [vmem:[%s3 + $0x28] sm:$0xff]
    %v115 = vld [vmem:[%s4] sm:$0x1]
    %v117 = vlaneseq
    %v118 = vshrl.u32 %v117, 7
    %v119 = vsub.s32 0, %v118
    %v120 = vrot.slane %v115, %v119
    %vm122 = vcmask 392192
    %v124 = vsel %vm122, %v108, 0
    %126 = vmatprep.subr.mxu0 0.0
    %127 = vmatpush1.msra.mxu0 0.0
    %128 = vmatprep.subr.mxu0 0.0
    %129 = vmatpush1.msra.mxu0 0.0
    %130 = vmatprep.subr.mxu0 0.0
    %131 = vmatpush1.msra.mxu0 0.0
    %132 = vmatprep.subr.mxu0 0.0
    %133 = vmatpush1.msra.mxu0 0.0
    %134 = vmatprep.subr.mxu0 0.0
    %135 = vmatpush1.msra.mxu0 0.0
    %136 = vmatprep.subr.mxu0 0.0
    %137 = vmatpush1.msra.mxu0 0.0
    %138 = vmatprep.subr.mxu0 0.0
    %139 = vmatpush1.msra.mxu0 0.0
    %140 = vmatprep.subr.mxu0 0.0
    %141 = vmatpush1.msra.mxu0 0.0
    %142 = vmatprep.subr.mxu0 0.0
    %143 = vmatpush1.msra.mxu0 0.0
    %144 = vmatprep.subr.mxu0 0.0
    %145 = vmatpush1.msra.mxu0 0.0
    %146 = vmatprep.subr.mxu0 0.0
    %147 = vmatpush1.msra.mxu0 %v114
    %148 = vmatprep.subr.mxu0 0.0
    %149 = vmatpush1.msra.mxu0 %v113
    %150 = vmatprep.subr.mxu0 0.0
    %151 = vmatpush1.msra.mxu0 %v112
    %152 = vmatprep.subr.mxu0 0.0
    %153 = vmatpush1.msra.mxu0 %v111
    %154 = vmatprep.subr.mxu0 0.0
    %155 = vmatpush1.msra.mxu0 %v110
    %156 = vmatprep.subr.mxu0 0.0
    %157 = vmatpush1.msra.mxu0 %v109
    %158 = vmatprep.subr.mxu0 0.0
    %159 = vmatpush2.msra.mxu0 0.0
    %160 = vmatprep.subr.mxu0 0.0
    %161 = vmatpush2.msra.mxu0 0.0
    %162 = vmatprep.subr.mxu0 0.0
    %163 = vmatpush2.msra.mxu0 0.0
    %164 = vmatprep.subr.mxu0 0.0
    %165 = vmatpush2.msra.mxu0 0.0
    %166 = vmatprep.subr.mxu0 0.0
    %167 = vmatpush2.msra.mxu0 0.0
    %168 = vmatprep.subr.mxu0 0.0
    %169 = vmatpush2.msra.mxu0 0.0
    %170 = vmatprep.subr.mxu0 0.0
    %171 = vmatpush2.msra.mxu0 0.0
    %172 = vmatprep.subr.mxu0 0.0
    %173 = vmatpush2.msra.mxu0 0.0
    %174 = vmatprep.subr.mxu0 0.0
    %175 = vmatpush2.msra.mxu0 0.0
    %176 = vmatprep.subr.mxu0 0.0
    %177 = vmatpush2.msra.mxu0 0.0
    %178 = vmatprep.subr.mxu0 0.0
    %179 = vmatpush2.msra.mxu0 0.0
    %180 = vmatprep.subr.mxu0 0.0
    %181 = vmatpush2.msra.mxu0 0.0
    %182 = vmatprep.subr.mxu0 0.0
    %183 = vmatpush2.msra.mxu0 0.0
    %184 = vmatprep.subr.mxu0 0.0
    %185 = vmatpush2.msra.mxu0 0.0
    %186 = vmatprep.subr.mxu0 0.0
    %187 = vmatpush2.msra.mxu0 0.0
    %188 = vmatprep.subr.mxu0 0.0
    %189 = vmatpush2.msra.mxu0 0.0
    %190 = vmatprep.mubr.f32.mxu0 0.0
    %191 = vmatmul.mubr.f32.gmra.mxu0 %v124
    %v192 = vpop.f32.mrf.mxu0
    %v193 = vadd.f32 %v120, %v192
    %v194 = vpop.f32.mrf.mxu0
    %195 = vdwg.mxu0
    %vm196 = vcmask 9216
    %197 = vst.msk [vmem:[#allocation2] sm:$0x3] %vm196, %v193
    // Predicated region
    $region22: #{qnetwork_forward.1} parent=1 // pred_check
      _
    $region23: #{qnetwork_forward.1} parent=1 // pred_check_branch
      %199 = sbr.rel (0) target = $region25
    $region24: #{qnetwork_forward.1} parent=1 // pred_region
      %s201 = ssub.s32 32, 32
      %202 = vsyncadd [#allocation3], %s201
      %s204 = sshll.u32 [#allocation2], 4
      %s205 = int_to_ptr.vmem [resolvable:$true] %s204
      %207 = dma.vmem_to_hbm [thread:$0]  %s205, 32, %s5, [#allocation3]
    $region25: #{qnetwork_forward.1} parent=1 // pred_fallthru
      _
    // Predicated region
    $region26: #{qnetwork_forward.1} parent=1 // pred_check
      _
    $region27: #{qnetwork_forward.1} parent=1 // pred_check_branch
      %209 = sbr.rel (0) target = $region29
    $region28: #{qnetwork_forward.1} parent=1 // pred_region
      %210 = dma.done [#allocation3], 32
    $region29: #{qnetwork_forward.1} parent=1 // pred_fallthru
      _
    %211 = vsyncpa [#allocation3], 1

</llo_original>
